<compile_context>
chip_gen: v7x
topology: tpu7x:2x2x1
jax: 0.10.0
libtpu: 0.0.40
codegen_flags: <defaults>
</compile_context>

<pallas_src>
import functools

import numpy as np
import jax
import jax.numpy as jnp
from jax.experimental import pallas as pl
from jax.experimental.pallas import tpu as pltpu


def _round_up(x, m):
    return ((x + m - 1) // m) * m


# ----------------------------------------------------------------------------
# Pallas kernel: bmm(Y, params) -> back-projection through M_inv -> masked err
# ----------------------------------------------------------------------------
def _bp_loss_kernel(yt_ref, yp_ref, minv_ref, p_ref, xgt_ref, valid_ref,
                    xcal_ref, stat_ref, *, batch_size):
    TB, N = xgt_ref.shape
    K = p_ref.shape[1]

    p = p_ref[...].astype(jnp.float32)        # (TB, K)  poly coefficients
    minv = minv_ref[...]                      # (1, 16)  row-major 3x3 (+pad)
    yp = yp_ref[...]                          # (1, N)   shared y'

    # x_prime = bmm(Y, params): K is tiny & static -> unrolled VPU MACs.
    x_prime = jnp.zeros((TB, N), dtype=jnp.float32)
    for k in range(K):                                    # static unroll
        x_prime = x_prime + yt_ref[k:k + 1, :] * p[:, k:k + 1]

    # rows 0 and 2 of M_inv @ [x'; y'; 1]
    t0 = minv[:, 0:1] * x_prime + minv[:, 1:2] * yp + minv[:, 2:3]
    t2 = minv[:, 6:7] * x_prime + minv[:, 7:8] * yp + minv[:, 8:9]

    # EUP approx reciprocal + two Newton-Raphson steps (~full f32 accuracy,
    # keeps VALU free; hidden under the DMA roofline anyway).
    r = pl.reciprocal(t2, approx=True)
    r = r * (2.0 - t2 * r)
    r = r * (2.0 - t2 * r)
    x_cal = t0 * r

    # Mask rows past the true batch size (ragged last block).  Use selects
    # (jnp.where), not multiplies, so garbage/NaN rows cannot poison sums.
    row = jax.lax.broadcasted_iota(jnp.int32, (TB, N), 0)
    in_bounds = (row + pl.program_id(0) * TB) < batch_size

    valid = jnp.where(in_bounds, valid_ref[...].astype(jnp.float32), 0.0)
    x_err = (xgt_ref[...] - x_cal) * valid

    xcal_ref[...] = jnp.where(in_bounds, x_cal * valid, 0.0)

    # per-block scalar partials, written into one tiny (8,128) tile:
    #   [0,0] = sum of squared error, [0,1] = sum of valid
    sq = jnp.sum(jnp.where(in_bounds, x_err * x_err, 0.0))
    vs = jnp.sum(valid)
    r8 = jax.lax.broadcasted_iota(jnp.int32, (8, 128), 0)
    c8 = jax.lax.broadcasted_iota(jnp.int32, (8, 128), 1)
    stat_ref[...] = jnp.where(
        (r8 == 0) & (c8 == 0), sq,
        jnp.where((r8 == 0) & (c8 == 1), vs, 0.0))


# ----------------------------------------------------------------------------
# Wrapper
# ----------------------------------------------------------------------------
def _choose_block_rows(batch, block_rows):
    """Batch tile: large enough to amortize the ~0.35us per-step overhead,
    >=2 blocks when the batch allows it (v7x megacore), multiple of 32 so an
    int8 `valid` stream tiles natively."""
    if batch <= 64:
        return batch                     # single block; dims equal full dims
    return max(32, min(_round_up(block_rows, 32),
                       _round_up((batch + 1) // 2, 32)))


def backprojection_loss_forward(params, x_gt, valid_samples,
                                yt, yp, minv16, *, block_rows=2048):
    """params: (B, K, 1) f32; x_gt: (B, N) f32; valid_samples: (B, N) in any
    numeric dtype (int8 recommended); yt: (K, N) f32; yp: (1, N) f32;
    minv16: (1, 16) f32.  Returns (loss, x_cal * valid) like the module."""
    B, N = x_gt.shape
    K = params.shape[1]
    f32 = jnp.float32

    p2d = params.reshape(B, K).astype(f32)      # squeeze: free reshape

    TB = _choose_block_rows(B, block_rows)
    G = -(-B // TB)

    valid_bytes = np.dtype(valid_samples.dtype).itemsize
    cost = pl.CostEstimate(
        flops=B * N * (2 * K + 14),
        transcendentals=B * N,
        bytes_accessed=(2 * B * N * 4                 # x_gt in, x_cal out
                        + B * N * valid_bytes         # valid in
                        + B * K * 4                   # params in
                        + G * 8 * 128 * 4),           # partial sums out
    )

    kernel = functools.partial(_bp_loss_kernel, batch_size=B)

    xcal, stats = pl.pallas_call(
        kernel,
        out_shape=(
            jax.ShapeDtypeStruct((B, N), f32),        # x_cal * valid (native)
            jax.ShapeDtypeStruct((G * 8, 128), f32),  # per-block partials
        ),
        grid_spec=pl.GridSpec(
            grid=(G,),
            in_specs=[
                pl.BlockSpec((K, N), lambda i: (0, 0)),     # Y^T    (shared)
                pl.BlockSpec((1, N), lambda i: (0, 0)),     # y'     (shared)
                pl.BlockSpec((1, 16), lambda i: (0, 0)),    # M_inv  (shared)
                pl.BlockSpec((TB, K), lambda i: (i, 0)),    # params
                pl.BlockSpec((TB, N), lambda i: (i, 0)),    # x_gt
                pl.BlockSpec((TB, N), lambda i: (i, 0)),    # valid
            ],
            out_specs=[
                pl.BlockSpec((TB, N), lambda i: (i, 0)),    # x_cal * valid
                pl.BlockSpec((8, 128), lambda i: (i, 0)),   # partial sums
            ],
        ),
        compiler_params=pltpu.CompilerParams(
            dimension_semantics=("parallel",)),
        cost_estimate=cost,
    )(yt, yp, minv16, p2d, x_gt.astype(f32), valid_samples)

    sq = jnp.sum(stats[:, 0])
    vsum = jnp.sum(stats[:, 1])
    loss = jnp.where(vsum == 0.0, f32(0.0),
                     sq / jnp.where(vsum == 0.0, f32(1.0), vsum))
    return loss, xcal


# ----------------------------------------------------------------------------
# Deterministic parameter / buffer setup (mirrors backprojection_loss.__init__)
# ----------------------------------------------------------------------------
def make_buffers(batch_size, order):
    # TODO(synk): get_homography() is not provided in the source repo; use a
    # deterministic, well-conditioned synthetic road-view homography instead.
    M = np.array([[0.5, -0.3, 100.0],
                  [0.0,  0.4,  50.0],
                  [0.0,  1e-3,  1.0]], dtype=np.float64)
    M_inv = np.linalg.inv(M)

    start, delta = 160, 10
    num_heights = (720 - start) // delta                       # 56
    y_d = (np.arange(start, 720, delta) - 80).astype(np.float64) / 2.5
    ones = np.ones(num_heights, dtype=np.float64)
    y_prime = (M[1, 1] * y_d + M[1, 2]) / (M[2, 1] * y_d + M[2, 2])
    y_eval = 255.0 - y_prime

    if order == 1:
        Ymat = np.stack((y_eval, ones), axis=1)
    elif order == 2:
        Ymat = np.stack((y_eval ** 2, y_eval, ones), axis=1)
    elif order == 3:
        Ymat = np.stack((y_eval ** 3, y_eval ** 2, y_eval, ones), axis=1)
    else:
        raise NotImplementedError(order)

    Y = np.broadcast_to(Ymat, (batch_size,) + Ymat.shape).copy()
    y_prime_b = np.broadcast_to(y_prime, (batch_size, num_heights)).copy()
    M_inv_b = np.broadcast_to(M_inv, (batch_size, 3, 3)).copy()
    return (jnp.asarray(Y, jnp.float32),
            jnp.asarray(y_prime_b, jnp.float32),
            jnp.asarray(M_inv_b, jnp.float32),
            num_heights)


def prepare_constant_buffers(Y, y_prime, M_inv):
    """One-time layout prep at module-init time (NOT per forward call).
    Y / y_prime / M_inv are batch-invariant -> keep a single copy each."""
    yt = jnp.transpose(Y[0], (1, 0)).astype(jnp.float32)          # (K, N)
    yp = y_prime[0].astype(jnp.float32).reshape(1, -1)             # (1, N)
    m = M_inv[0].reshape(-1).astype(jnp.float32)                   # (9,)
    minv16 = jnp.pad(m, (0, 16 - m.shape[0])).reshape(1, 16)       # (1, 16)
    return yt, yp, minv16


# ----------------------------------------------------------------------------
# Pure-JAX reference (mirrors the PyTorch forward exactly) for verification
# ----------------------------------------------------------------------------
def reference_forward(params, x_gt, valid, Y, y_prime, M_inv):
    x_prime = jnp.matmul(Y, params)[..., 0]                      # (B, N)
    ones = jnp.ones_like(x_prime)
    coords = jnp.stack((x_prime, y_prime, ones), axis=1)          # (B, 3, N)
    trans = jnp.matmul(M_inv, coords)                             # (B, 3, N)
    x_cal = trans[:, 0, :] / trans[:, 2, :]
    x_err = (x_gt - x_cal) * valid
    vsum = valid.sum()
    loss = jnp.where(vsum == 0, 0.0, jnp.sum(x_err ** 2) / vsum)
    return loss, x_cal * valid


if __name__ == "__main__":
    batch_size = 2
    order = 2
    K = order + 1

    Y, y_prime, M_inv, num_heights = make_buffers(batch_size, order)
    yt, yp, minv16 = prepare_constant_buffers(Y, y_prime, M_inv)

    key = jax.random.PRNGKey(0)
    k1, k2, k3 = jax.random.split(key, 3)
    params = 0.01 * jax.random.normal(k1, (batch_size, K, 1), dtype=jnp.float32)
    x_gt = 50.0 * jax.random.normal(k2, (batch_size, num_heights),
                                    dtype=jnp.float32)
    # Boolean mask shipped as int8: 4x fewer HBM bytes for one of the three
    # large per-call streams; cast to f32 inside the kernel.
    valid_samples = (jax.random.uniform(k3, (batch_size, num_heights)) > 0.3
                     ).astype(jnp.int8)

    loss, x_cal_masked = backprojection_loss_forward(
        params, x_gt, valid_samples, yt, yp, minv16)
    jax.block_until_ready((loss, x_cal_masked))

    # correctness check vs pure-JAX reference
    loss_ref, xcal_ref = reference_forward(
        params, x_gt, valid_samples.astype(jnp.float32), Y, y_prime, M_inv)
    np.testing.assert_allclose(np.asarray(loss), np.asarray(loss_ref),
                               rtol=1e-4, atol=1e-4)
    np.testing.assert_allclose(np.asarray(x_cal_masked), np.asarray(xcal_ref),
                               rtol=1e-4, atol=1e-3)

    print("KERNEL_OK")
</pallas_src>

<mosaic_0001>
module attributes {stable_mosaic.version = 11 : i64} {
  func.func @_bp_loss_kernel(%arg0: i32, %arg1: memref<3x56xf32, #tpu.memory_space<vmem>>, %arg2: memref<1x56xf32, #tpu.memory_space<vmem>>, %arg3: memref<1x16xf32, #tpu.memory_space<vmem>>, %arg4: memref<2x3xf32, #tpu.memory_space<vmem>>, %arg5: memref<2x56xf32, #tpu.memory_space<vmem>>, %arg6: memref<2x56xi8, #tpu.memory_space<vmem>>, %arg7: memref<2x56xf32, #tpu.memory_space<vmem>>, %arg8: memref<8x128xf32, #tpu.memory_space<vmem>>) attributes {dimension_semantics = [#tpu.dimension_semantics<parallel>], iteration_bounds = array<i64: 1>, scalar_prefetch = 0 : i64, scratch_operands = 0 : i64, tpu.core_type = #tpu.core_type<tc>, window_params = [{pipeline_mode = #tpu.pipeline_mode<synchronous>, transform_indices = @transform_0, window_bounds = array<i64: 3, 56>}, {pipeline_mode = #tpu.pipeline_mode<synchronous>, transform_indices = @transform_1, window_bounds = array<i64: 1, 56>}, {pipeline_mode = #tpu.pipeline_mode<synchronous>, transform_indices = @transform_2, window_bounds = array<i64: 1, 16>}, {transform_indices = @transform_3, window_bounds = array<i64: 2, 3>}, {transform_indices = @transform_4, window_bounds = array<i64: 2, 56>}, {transform_indices = @transform_5, window_bounds = array<i64: 2, 56>}, {transform_indices = @transform_6, window_bounds = array<i64: 2, 56>}, {transform_indices = @transform_7, window_bounds = array<i64: 8, 128>}]} {
    %c0 = arith.constant 0 : index
    %c0_0 = arith.constant 0 : index
    %0 = vector.load %arg4[%c0, %c0_0] : memref<2x3xf32, #tpu.memory_space<vmem>>, vector<2x3xf32>
    %c0_1 = arith.constant 0 : index
    %c0_2 = arith.constant 0 : index
    %1 = vector.load %arg3[%c0_1, %c0_2] : memref<1x16xf32, #tpu.memory_space<vmem>>, vector<1x16xf32>
    %c0_3 = arith.constant 0 : index
    %c0_4 = arith.constant 0 : index
    %2 = vector.load %arg2[%c0_3, %c0_4] : memref<1x56xf32, #tpu.memory_space<vmem>>, vector<1x56xf32>
    %cst = arith.constant 0.000000e+00 : f32
    %3 = vector.broadcast %cst : f32 to vector<2x56xf32>
    %c0_5 = arith.constant 0 : index
    %c0_6 = arith.constant 0 : index
    %4 = vector.load %arg1[%c0_5, %c0_6] : memref<3x56xf32, #tpu.memory_space<vmem>>, vector<1x56xf32>
    %5 = vector.extract_strided_slice %0 {offsets = [0, 0], sizes = [2, 1], strides = [1, 1]} : vector<2x3xf32> to vector<2x1xf32>
    %6 = vector.broadcast %4 : vector<1x56xf32> to vector<2x56xf32>
    %7 = vector.broadcast %5 : vector<2x1xf32> to vector<2x56xf32>
    %8 = arith.mulf %6, %7 : vector<2x56xf32>
    %9 = arith.addf %3, %8 : vector<2x56xf32>
    %c1 = arith.constant 1 : index
    %c0_7 = arith.constant 0 : index
    %10 = vector.load %arg1[%c1, %c0_7] : memref<3x56xf32, #tpu.memory_space<vmem>>, vector<1x56xf32>
    %11 = vector.extract_strided_slice %0 {offsets = [0, 1], sizes = [2, 1], strides = [1, 1]} : vector<2x3xf32> to vector<2x1xf32>
    %12 = vector.broadcast %10 : vector<1x56xf32> to vector<2x56xf32>
    %13 = vector.broadcast %11 : vector<2x1xf32> to vector<2x56xf32>
    %14 = arith.mulf %12, %13 : vector<2x56xf32>
    %15 = arith.addf %9, %14 : vector<2x56xf32>
    %c2 = arith.constant 2 : index
    %c0_8 = arith.constant 0 : index
    %16 = vector.load %arg1[%c2, %c0_8] : memref<3x56xf32, #tpu.memory_space<vmem>>, vector<1x56xf32>
    %17 = vector.extract_strided_slice %0 {offsets = [0, 2], sizes = [2, 1], strides = [1, 1]} : vector<2x3xf32> to vector<2x1xf32>
    %18 = vector.broadcast %16 : vector<1x56xf32> to vector<2x56xf32>
    %19 = vector.broadcast %17 : vector<2x1xf32> to vector<2x56xf32>
    %20 = arith.mulf %18, %19 : vector<2x56xf32>
    %21 = arith.addf %15, %20 : vector<2x56xf32>
    %22 = vector.extract_strided_slice %1 {offsets = [0, 0], sizes = [1, 1], strides = [1, 1]} : vector<1x16xf32> to vector<1x1xf32>
    %23 = vector.broadcast %22 : vector<1x1xf32> to vector<2x56xf32>
    %24 = arith.mulf %23, %21 : vector<2x56xf32>
    %25 = vector.extract_strided_slice %1 {offsets = [0, 1], sizes = [1, 1], strides = [1, 1]} : vector<1x16xf32> to vector<1x1xf32>
    %26 = vector.broadcast %25 : vector<1x1xf32> to vector<1x56xf32>
    %27 = arith.mulf %26, %2 : vector<1x56xf32>
    %28 = vector.broadcast %27 : vector<1x56xf32> to vector<2x56xf32>
    %29 = arith.addf %24, %28 : vector<2x56xf32>
    %30 = vector.extract_strided_slice %1 {offsets = [0, 2], sizes = [1, 1], strides = [1, 1]} : vector<1x16xf32> to vector<1x1xf32>
    %31 = vector.broadcast %30 : vector<1x1xf32> to vector<2x56xf32>
    %32 = arith.addf %29, %31 : vector<2x56xf32>
    %33 = vector.extract_strided_slice %1 {offsets = [0, 6], sizes = [1, 1], strides = [1, 1]} : vector<1x16xf32> to vector<1x1xf32>
    %34 = vector.broadcast %33 : vector<1x1xf32> to vector<2x56xf32>
    %35 = arith.mulf %34, %21 : vector<2x56xf32>
    %36 = vector.extract_strided_slice %1 {offsets = [0, 7], sizes = [1, 1], strides = [1, 1]} : vector<1x16xf32> to vector<1x1xf32>
    %37 = vector.broadcast %36 : vector<1x1xf32> to vector<1x56xf32>
    %38 = arith.mulf %37, %2 : vector<1x56xf32>
    %39 = vector.broadcast %38 : vector<1x56xf32> to vector<2x56xf32>
    %40 = arith.addf %35, %39 : vector<2x56xf32>
    %41 = vector.extract_strided_slice %1 {offsets = [0, 8], sizes = [1, 1], strides = [1, 1]} : vector<1x16xf32> to vector<1x1xf32>
    %42 = vector.broadcast %41 : vector<1x1xf32> to vector<2x56xf32>
    %43 = arith.addf %40, %42 : vector<2x56xf32>
    %44 = tpu.reciprocal %43 {approx = true} : vector<2x56xf32> -> vector<2x56xf32>
    %45 = arith.mulf %43, %44 : vector<2x56xf32>
    %cst_9 = arith.constant 2.000000e+00 : f32
    %46 = vector.broadcast %cst_9 : f32 to vector<2x56xf32>
    %47 = arith.subf %46, %45 : vector<2x56xf32>
    %48 = arith.mulf %44, %47 : vector<2x56xf32>
    %49 = arith.mulf %43, %48 : vector<2x56xf32>
    %cst_10 = arith.constant 2.000000e+00 : f32
    %50 = vector.broadcast %cst_10 : f32 to vector<2x56xf32>
    %51 = arith.subf %50, %49 : vector<2x56xf32>
    %52 = arith.mulf %48, %51 : vector<2x56xf32>
    %53 = arith.mulf %32, %52 : vector<2x56xf32>
    %54 = tpu.iota {dimensions = array<i32: 0>} : vector<2x56xi32>
    %c2_i32 = arith.constant 2 : i32
    %55 = arith.muli %arg0, %c2_i32 : i32
    %56 = vector.broadcast %55 : i32 to vector<2x56xi32>
    %57 = arith.addi %54, %56 : vector<2x56xi32>
    %c2_i32_11 = arith.constant 2 : i32
    %58 = vector.broadcast %c2_i32_11 : i32 to vector<2x56xi32>
    %59 = arith.cmpi slt, %57, %58 : vector<2x56xi32>
    %c0_12 = arith.constant 0 : index
    %c0_13 = arith.constant 0 : index
    %60 = vector.load %arg6[%c0_12, %c0_13] : memref<2x56xi8, #tpu.memory_space<vmem>>, vector<2x56xi8>
    %61 = arith.sitofp %60 : vector<2x56xi8> to vector<2x56xf32>
    %cst_14 = arith.constant 0.000000e+00 : f32
    %62 = vector.broadcast %cst_14 : f32 to vector<2x56xf32>
    %63 = arith.select %59, %61, %62 : vector<2x56xi1>, vector<2x56xf32>
    %c0_15 = arith.constant 0 : index
    %c0_16 = arith.constant 0 : index
    %64 = vector.load %arg5[%c0_15, %c0_16] : memref<2x56xf32, #tpu.memory_space<vmem>>, vector<2x56xf32>
    %65 = arith.subf %64, %53 : vector<2x56xf32>
    %66 = arith.mulf %65, %63 : vector<2x56xf32>
    %67 = arith.mulf %53, %63 : vector<2x56xf32>
    %cst_17 = arith.constant 0.000000e+00 : f32
    %68 = vector.broadcast %cst_17 : f32 to vector<2x56xf32>
    %69 = arith.select %59, %67, %68 : vector<2x56xi1>, vector<2x56xf32>
    %c0_18 = arith.constant 0 : index
    %c0_19 = arith.constant 0 : index
    %70 = vector.load %arg7[%c0_18, %c0_19] : memref<2x56xf32, #tpu.memory_space<vmem>>, vector<2x56xf32>
    tpu.vector_store %arg7[%c0_18, %c0_19], %69 {strides = array<i32>} : memref<2x56xf32, #tpu.memory_space<vmem>>, vector<2x56xf32>,
    %71 = arith.mulf %66, %66 : vector<2x56xf32>
    %cst_20 = arith.constant 0.000000e+00 : f32
    %72 = vector.broadcast %cst_20 : f32 to vector<2x56xf32>
    %73 = arith.select %59, %71, %72 : vector<2x56xi1>, vector<2x56xf32>
    %74 = vector.shape_cast %73 : vector<2x56xf32> to vector<1x2x56xf32>
    %cst_21 = arith.constant dense<0.000000e+00> : vector<1xf32>
    %75 = vector.multi_reduction <add>, %74, %cst_21 [1, 2] : vector<1x2x56xf32> to vector<1xf32>
    %76 = vector.shape_cast %75 : vector<1xf32> to vector<1x1x1xf32>
    %77 = vector.extract %76[0, 0, 0] : f32 from vector<1x1x1xf32>
    %78 = vector.shape_cast %63 : vector<2x56xf32> to vector<1x2x56xf32>
    %cst_22 = arith.constant dense<0.000000e+00> : vector<1xf32>
    %79 = vector.multi_reduction <add>, %78, %cst_22 [1, 2] : vector<1x2x56xf32> to vector<1xf32>
    %80 = vector.shape_cast %79 : vector<1xf32> to vector<1x1x1xf32>
    %81 = vector.extract %80[0, 0, 0] : f32 from vector<1x1x1xf32>
    %82 = tpu.iota {dimensions = array<i32: 0>} : vector<8x128xi32>
    %83 = tpu.iota {dimensions = array<i32: 1>} : vector<8x128xi32>
    %c0_i32 = arith.constant 0 : i32
    %84 = vector.broadcast %c0_i32 : i32 to vector<8x128xi32>
    %85 = arith.cmpi eq, %82, %84 : vector<8x128xi32>
    %c0_i32_23 = arith.constant 0 : i32
    %86 = vector.broadcast %c0_i32_23 : i32 to vector<8x128xi32>
    %87 = arith.cmpi eq, %83, %86 : vector<8x128xi32>
    %88 = arith.andi %85, %87 : vector<8x128xi1>
    %c0_i32_24 = arith.constant 0 : i32
    %89 = vector.broadcast %c0_i32_24 : i32 to vector<8x128xi32>
    %90 = arith.cmpi eq, %82, %89 : vector<8x128xi32>
    %c1_i32 = arith.constant 1 : i32
    %91 = vector.broadcast %c1_i32 : i32 to vector<8x128xi32>
    %92 = arith.cmpi eq, %83, %91 : vector<8x128xi32>
    %93 = arith.andi %90, %92 : vector<8x128xi1>
    %cst_25 = arith.constant 0.000000e+00 : f32
    %94 = vector.broadcast %81 : f32 to vector<8x128xf32>
    %95 = vector.broadcast %cst_25 : f32 to vector<8x128xf32>
    %96 = arith.select %93, %94, %95 : vector<8x128xi1>, vector<8x128xf32>
    %97 = vector.broadcast %77 : f32 to vector<8x128xf32>
    %98 = arith.select %88, %97, %96 : vector<8x128xi1>, vector<8x128xf32>
    %c0_26 = arith.constant 0 : index
    %c0_27 = arith.constant 0 : index
    %99 = vector.load %arg8[%c0_26, %c0_27] : memref<8x128xf32, #tpu.memory_space<vmem>>, vector<8x128xf32>
    tpu.vector_store %arg8[%c0_26, %c0_27], %98 {strides = array<i32>} : memref<8x128xf32, #tpu.memory_space<vmem>>, vector<8x128xf32>,
    return
  }
  func.func @transform_0(%arg0: i32) -> (i32, i32) {
    %c0_i32 = arith.constant 0 : i32
    %c0_i32_0 = arith.constant 0 : i32
    %c0_i32_1 = arith.constant 0 : i32
    return %c0_i32, %c0_i32_0 : i32, i32
  }
  func.func @transform_1(%arg0: i32) -> (i32, i32) {
    %c0_i32 = arith.constant 0 : i32
    %c0_i32_0 = arith.constant 0 : i32
    %c0_i32_1 = arith.constant 0 : i32
    return %c0_i32, %c0_i32_0 : i32, i32
  }
  func.func @transform_2(%arg0: i32) -> (i32, i32) {
    %c0_i32 = arith.constant 0 : i32
    %c0_i32_0 = arith.constant 0 : i32
    %c0_i32_1 = arith.constant 0 : i32
    return %c0_i32, %c0_i32_0 : i32, i32
  }
  func.func @transform_3(%arg0: i32) -> (i32, i32) {
    %c0_i32 = arith.constant 0 : i32
    %c0_i32_0 = arith.constant 0 : i32
    return %arg0, %c0_i32 : i32, i32
  }
  func.func @transform_4(%arg0: i32) -> (i32, i32) {
    %c0_i32 = arith.constant 0 : i32
    %c0_i32_0 = arith.constant 0 : i32
    return %arg0, %c0_i32 : i32, i32
  }
  func.func @transform_5(%arg0: i32) -> (i32, i32) {
    %c0_i32 = arith.constant 0 : i32
    %c0_i32_0 = arith.constant 0 : i32
    return %arg0, %c0_i32 : i32, i32
  }
  func.func @transform_6(%arg0: i32) -> (i32, i32) {
    %c0_i32 = arith.constant 0 : i32
    %c0_i32_0 = arith.constant 0 : i32
    return %arg0, %c0_i32 : i32, i32
  }
  func.func @transform_7(%arg0: i32) -> (i32, i32) {
    %c0_i32 = arith.constant 0 : i32
    %c0_i32_0 = arith.constant 0 : i32
    return %arg0, %c0_i32 : i32, i32
  }
}

</mosaic_0001>

<llo_original>
// kernel: tpu_custom_call.1
$region0: #{tpu_custom_call.1}
  #allocation0 [shape = 'u32[]', space=smem, size = 0x4, offset = 0x4, fixed_abs, tag = 'smem constant byte address 0x4 - core index']
  #allocation1 [shape = 'u32[144,128]{1,0:T(1,128)}', space=vmem, size = 0x12000, scoped, tag = 'internal scratch']
  %s0 = inlined_call_operand.hbm [shape: f32[3,56], index: 0, kind: input, shape index: {}]
  %s1 = inlined_call_operand.vmem [shape: f32[1,56], index: 1, kind: input, shape index: {}]
  %s2 = inlined_call_operand.vmem [shape: f32[1,16], index: 2, kind: input, shape index: {}]
  %s3 = inlined_call_operand.vmem [shape: f32[2,3], index: 3, kind: input, shape index: {}]
  %s4 = inlined_call_operand.vmem [shape: f32[2,56], index: 4, kind: input, shape index: {}]
  %s5 = inlined_call_operand.vmem [shape: s8[2,56], index: 5, kind: input, shape index: {}]
  %s6 = inlined_call_operand.hbm [shape: f32[2,56], index: 6, kind: output, shape index: {0}]
  %s7 = inlined_call_operand.hbm [shape: f32[8,128], index: 7, kind: output, shape index: {1}]
  %8 = xla_tuple %s6, %s7
  %s9 = sld [smem:[#allocation0]]
  $region46: #{tpu_custom_call.1} parent=0
    _
  %s11 = ssub.s32 1, %s9
  %s12 = scalar_select 0, %s11, %s9
  $region1: #{tpu_custom_call.1} parent=0
    #allocation2 [shape = 'u8[2048]{0}', space=vmem, size = 0x800, scoped, tag = 'input window, operand 0, single buffered']
    #allocation3 [shape = 's32[1]{0}', space=sflag, size = 0x4, scoped, tag = 'scoped memory for tpu_custom_call.1']
    #allocation4 [shape = 's32[1]{0}', space=sflag, size = 0x4, scoped, tag = 'scoped memory for tpu_custom_call.1']
    #allocation5 [shape = 'u8[1024]{0}', space=vmem, size = 0x400, scoped, tag = 'output window, operand 0, single buffered']
    #allocation6 [shape = 'u8[4096]{0}', space=vmem, size = 0x1000, scoped, tag = 'output window, operand 1, single buffered']
    #allocation7 [shape = 's32[1]{0}', space=sflag, size = 0x4, scoped, tag = 'scoped memory for tpu_custom_call.1']
    %13 = vsyncpa [#allocation3], 0
    %14 = vsyncpa [#allocation4], 0
    %15 = vsyncpa [#allocation7], 0
    // Predicated region
    $region2: #{tpu_custom_call.1} parent=1 // pred_check
      _
    $region3: #{tpu_custom_call.1} parent=1 // pred_check_branch
      %17 = sbr.rel (0) target = $region5
    $region4: #{tpu_custom_call.1} parent=1 // pred_region
      %s19 = ssub.s32 64, 64
      %20 = vsyncadd [#allocation3], %s19
      %s22 = sshll.u32 [#allocation2], 4
      %s23 = int_to_ptr.vmem [resolvable:$true] %s22
      %25 = dma.hbm_to_vmem [thread:$0]  %s0, 64, %s23, [#allocation3]
    $region5: #{tpu_custom_call.1} parent=1 // pred_fallthru
      _
    // Predicated region
    $region6: #{tpu_custom_call.1} parent=1 // pred_check
      _
    $region7: #{tpu_custom_call.1} parent=1 // pred_check_branch
      %27 = sbr.rel (0) target = $region9
    $region8: #{tpu_custom_call.1} parent=1 // pred_region
      _
    $region9: #{tpu_custom_call.1} parent=1 // pred_fallthru
      _
    // Predicated region
    $region10: #{tpu_custom_call.1} parent=1 // pred_check
      _
    $region11: #{tpu_custom_call.1} parent=1 // pred_check_branch
      %29 = sbr.rel (0) target = $region13
    $region12: #{tpu_custom_call.1} parent=1 // pred_region
      _
    $region13: #{tpu_custom_call.1} parent=1 // pred_fallthru
      _
    // Predicated region
    $region14: #{tpu_custom_call.1} parent=1 // pred_check
      _
    $region15: #{tpu_custom_call.1} parent=1 // pred_check_branch
      %31 = sbr.rel (0) target = $region17
    $region16: #{tpu_custom_call.1} parent=1 // pred_region
      _
    $region17: #{tpu_custom_call.1} parent=1 // pred_fallthru
      _
    // Predicated region
    $region18: #{tpu_custom_call.1} parent=1 // pred_check
      _
    $region19: #{tpu_custom_call.1} parent=1 // pred_check_branch
      %33 = sbr.rel (0) target = $region21
    $region20: #{tpu_custom_call.1} parent=1 // pred_region
      _
    $region21: #{tpu_custom_call.1} parent=1 // pred_fallthru
      _
    // Predicated region
    $region22: #{tpu_custom_call.1} parent=1 // pred_check
      _
    $region23: #{tpu_custom_call.1} parent=1 // pred_check_branch
      %35 = sbr.rel (0) target = $region25
    $region24: #{tpu_custom_call.1} parent=1 // pred_region
      _
    $region25: #{tpu_custom_call.1} parent=1 // pred_fallthru
      _
    // Predicated region
    $region26: #{tpu_custom_call.1} parent=1 // pred_check
      _
    $region27: #{tpu_custom_call.1} parent=1 // pred_check_branch
      %37 = sbr.rel (0) target = $region29
    $region28: #{tpu_custom_call.1} parent=1 // pred_region
      %38 = dma.done [#allocation3], 64
    $region29: #{tpu_custom_call.1} parent=1 // pred_fallthru
      _
    %v39 = vld [vmem:[%s3] sm:$0x3]
    %v40 = vld [vmem:[%s2] sm:$0x1]
    %v41 = vld [vmem:[%s1] sm:$0x1]
    %v42 = vld [vmem:[#allocation2] sm:$0x1]
    %v43 = vlaneseq
    %v44 = vshrl.u32 %v43, 7
    %v45 = vsub.s32 0, %v44
    %v46 = vrot.slane %v42, %v45
    %48 = vset.pattern.permute.xlu0 0
    %49 = vperm.xlu0 %48, %v39
    %v50 = vpop.permute.xlu0 %49
    %v52 = vmul.f32 %v46, %v50
    %v53 = vadd.f32 %v52, 0.0
    %v54 = vld [vmem:[#allocation2 + $0x1] sm:$0x1]
    %v55 = vlaneseq
    %v56 = vshrl.u32 %v55, 7
    %v57 = vsub.s32 0, %v56
    %v58 = vrot.slane %v54, %v57
    %59 = vset.pattern.permute.xlu0 1
    %60 = vperm.xlu0 %59, %v39
    %v61 = vpop.permute.xlu0 %60
    %v63 = vmul.f32 %v58, %v61
    %v64 = vadd.f32 %v53, %v63
    %v65 = vld [vmem:[#allocation2 + $0x2] sm:$0x1]
    %v66 = vlaneseq
    %v67 = vshrl.u32 %v66, 7
    %v68 = vsub.s32 0, %v67
    %v69 = vrot.slane %v65, %v68
    %70 = vset.pattern.permute.xlu0 2
    %71 = vperm.xlu0 %70, %v39
    %v72 = vpop.permute.xlu0 %71
    %v74 = vmul.f32 %v69, %v72
    %v75 = vadd.f32 %v64, %v74
    %v77 = vlaneseq
    %v78 = vshrl.u32 %v77, 7
    %v79 = vsub.s32 0, %v78
    %v80 = vrot.slane %v40, %v79
    %81 = vset.pattern.permute.xlu0 0
    %82 = vperm.xlu0 %81, %v80
    %v83 = vpop.permute.xlu0 %82
    %v85 = vmul.f32 %v83, %v75
    %86 = vset.pattern.permute.xlu0 1
    %87 = vperm.xlu0 %86, %v40
    %v88 = vpop.permute.xlu0 %87
    %v90 = vlaneseq
    %v91 = vshrl.u32 %v90, 7
    %v92 = vsub.s32 0, %v91
    %v93 = vrot.slane %v88, %v92
    %v94 = vmul.f32 %v93, %v41
    %v96 = vlaneseq
    %v97 = vshrl.u32 %v96, 7
    %v98 = vsub.s32 0, %v97
    %v99 = vrot.slane %v94, %v98
    %v101 = vadd.f32 %v85, %v99
    %102 = vset.pattern.permute.xlu0 2
    %103 = vperm.xlu0 %102, %v80
    %v104 = vpop.permute.xlu0 %103
    %v106 = vadd.f32 %v101, %v104
    %107 = vset.pattern.permute.xlu0 6
    %108 = vperm.xlu0 %107, %v80
    %v109 = vpop.permute.xlu0 %108
    %v111 = vmul.f32 %v109, %v75
    %112 = vset.pattern.permute.xlu0 7
    %113 = vperm.xlu0 %112, %v40
    %v114 = vpop.permute.xlu0 %113
    %v116 = vlaneseq
    %v117 = vshrl.u32 %v116, 7
    %v118 = vsub.s32 0, %v117
    %v119 = vrot.slane %v114, %v118
    %v120 = vmul.f32 %v119, %v41
    %v122 = vlaneseq
    %v123 = vshrl.u32 %v122, 7
    %v124 = vsub.s32 0, %v123
    %v125 = vrot.slane %v120, %v124
    %v127 = vadd.f32 %v111, %v125
    %128 = vset.pattern.permute.xlu0 8
    %129 = vperm.xlu0 %128, %v80
    %v130 = vpop.permute.xlu0 %129
    %v132 = vadd.f32 %v127, %v130
    %v133 = vrcp.pop %v132
    %v134 = vmul.f32 %v132, %v133
    %v135 = vsub.f32 2.0, %v134
    %v136 = vmul.f32 %v133, %v135
    %v137 = vmul.f32 %v132, %v136
    %v138 = vsub.f32 2.0, %v137
    %v139 = vmul.f32 %v136, %v138
    %v140 = vmul.f32 %v106, %v139
    %v141 = vlaneseq
    %v142 = vshrl.u32 %v141, 7
    %s143 = smul.u32 0, 2
    %v144 = vstv %s143
    %v145 = vadd.s32 %v142, %v144
    %vm146 = vcmp.lt.s32.totalorder %v145, 2
    %v147 = vld [vmem:[%s5] sm:$0x1]
    %v148 = vunpack.c.0.s8 %v147
    %v149 = vcvt.s32.f32 %v148
    %v150 = vsel %vm146, %v149, 0.0
    %v151 = vld [vmem:[%s4] sm:$0x3]
    %v152 = vsub.f32 %v151, %v140
    %v153 = vmul.f32 %v152, %v150
    %v154 = vmul.f32 %v140, %v150
    %v155 = vsel %vm146, %v154, 0.0
    %vm156 = vcmask 451584
    %157 = vst.msk [vmem:[#allocation5] sm:$0x3] %vm156, %v155
    %v158 = vmul.f32 %v153, %v153
    %v159 = vsel %vm146, %v158, 0.0
    %v160 = vsel %vm156, %v159, 0.0
    %161 = vadd.xlane.f32.xlu0 %v160
    %v162 = vpop.xlane.xlu0 %161
    %v163 = vrot.slane %v162, 4
    %v164 = vadd.f32 %v162, %v163
    %v165 = vrot.slane %v164, 2
    %v166 = vadd.f32 %v164, %v165
    %v167 = vrot.slane %v166, 1
    %v168 = vadd.f32 %v166, %v167
    %s169 = vtos %v168
    %v170 = vsel %vm156, %v150, 0.0
    %171 = vadd.xlane.f32.xlu0 %v170
    %v172 = vpop.xlane.xlu0 %171
    %v173 = vrot.slane %v172, 4
    %v174 = vadd.f32 %v172, %v173
    %v175 = vrot.slane %v174, 2
    %v176 = vadd.f32 %v174, %v175
    %v177 = vrot.slane %v176, 1
    %v178 = vadd.f32 %v176, %v177
    %s179 = vtos %v178
    %v180 = vlaneseq
    %v181 = vand.u32 %v180, 127
    %vm182 = vcmp.eq.s32.totalorder %v142, 0
    %vm183 = vcmp.eq.s32.totalorder %v181, 0
    %vm184 = vmand %vm182, %vm183
    %vm185 = vcmp.eq.s32.totalorder %v181, 1
    %vm186 = vmand %vm182, %vm185
    %v187 = vstv %s179
    %v188 = vsel %vm186, %v187, 0.0
    %v189 = vstv %s169
    %v190 = vsel %vm184, %v189, %v188
    %191 = vst [vmem:[#allocation6] sm:$0xff] %v190
    // Predicated region
    $region30: #{tpu_custom_call.1} parent=1 // pred_check
      _
    $region31: #{tpu_custom_call.1} parent=1 // pred_check_branch
      %193 = sbr.rel (0) target = $region33
    $region32: #{tpu_custom_call.1} parent=1 // pred_region
      %s195 = ssub.s32 32, 32
      %196 = vsyncadd [#allocation4], %s195
      %s198 = sshll.u32 [#allocation5], 4
      %s199 = int_to_ptr.vmem [resolvable:$true] %s198
      %201 = dma.vmem_to_hbm [thread:$0]  %s199, 32, %s6, [#allocation4]
    $region33: #{tpu_custom_call.1} parent=1 // pred_fallthru
      _
    // Predicated region
    $region34: #{tpu_custom_call.1} parent=1 // pred_check
      _
    $region35: #{tpu_custom_call.1} parent=1 // pred_check_branch
      %203 = sbr.rel (0) target = $region37
    $region36: #{tpu_custom_call.1} parent=1 // pred_region
      %s205 = ssub.s32 128, 128
      %206 = vsyncadd [#allocation7], %s205
      %s208 = sshll.u32 [#allocation6], 4
      %s209 = int_to_ptr.vmem [resolvable:$true] %s208
      %211 = dma.vmem_to_hbm [thread:$0]  %s209, 128, %s7, [#allocation7]
    $region37: #{tpu_custom_call.1} parent=1 // pred_fallthru
      _
    // Predicated region
    $region38: #{tpu_custom_call.1} parent=1 // pred_check
      _
    $region39: #{tpu_custom_call.1} parent=1 // pred_check_branch
      %213 = sbr.rel (0) target = $region41
    $region40: #{tpu_custom_call.1} parent=1 // pred_region
      %214 = dma.done [#allocation4], 32
    $region41: #{tpu_custom_call.1} parent=1 // pred_fallthru
      _
    // Predicated region
    $region42: #{tpu_custom_call.1} parent=1 // pred_check
      _
    $region43: #{tpu_custom_call.1} parent=1 // pred_check_branch
      %216 = sbr.rel (0) target = $region45
    $region44: #{tpu_custom_call.1} parent=1 // pred_region
      %217 = dma.done [#allocation7], 128
    $region45: #{tpu_custom_call.1} parent=1 // pred_fallthru
      _
    %218 = vsyncpa [#allocation3], 1
    %219 = vsyncpa [#allocation4], 1
    %220 = vsyncpa [#allocation7], 1

</llo_original>
